<compile_context>
chip_gen: v7x
topology: tpu7x:2x2x1
jax: 0.10.0
libtpu: 0.0.40
codegen_flags: <defaults>
</compile_context>

<pallas_src>
import math
import numpy as np
import jax
import jax.numpy as jnp
from jax.experimental import pallas as pl
from jax.experimental.pallas import tpu as pltpu

# ---------------- small synthetic config ----------------
RESOLUTION = 16
CHANNEL_DIM = 4          # const channels (and fc channels for var_repeat=False)
MOTION_W_DIM = 16
W_DIM = 32
BATCH = 2

LRELU_SLOPE = 0.2
LRELU_GAIN = float(np.sqrt(2.0))   # bias_act gain for 'lrelu' (folded into fc params)

_CPARAMS = pltpu.CompilerParams(dimension_semantics=("arbitrary",))  # single-step grid


# ---------------------------------------------------------------------------
# Pallas kernels (whole forward fused into one call; whole batch in one block)
# ---------------------------------------------------------------------------
def _const_motion_kernel(const_ref, mw_ref, out_ref):
    # const_ref: (Cc, RR)   mw_ref: (B, Cm, 1)   out_ref: (B, Cc+Cm, RR)
    cc, rr = const_ref.shape
    b, cm, _ = mw_ref.shape
    const_b = jnp.broadcast_to(const_ref[...][None], (b, cc, rr))
    motion = jnp.broadcast_to(mw_ref[...], (b, cm, rr))   # cheap lane-broadcast per scalar
    # Assemble once, store once (single full-block store).
    out_ref[...] = jnp.concatenate([const_b, motion], axis=1)


def _const_motion_fc_kernel(const_ref, mw_ref, w_ref, wt_ref, b_ref, out_ref):
    # const_ref: (Cc, RR)        mw_ref: (B, Cm, 1)      w_ref: (B, Dw) f32
    # wt_ref:   (Dw, Cc*RR) bf16 b_ref: (1, Cc*RR) f32   out_ref: (B, Cc+Cm+Cc, RR)
    cc, rr = const_ref.shape
    b, cm, _ = mw_ref.shape

    const_b = jnp.broadcast_to(const_ref[...][None], (b, cc, rr))
    motion = jnp.broadcast_to(mw_ref[...], (b, cm, rr))

    # Batched FC: one (B, Dw) @ (Dw, Cc*RR) MXU matmul, bf16 inputs, f32 accumulation.
    # eqLR gain and the post-lrelu sqrt(2) gain are pre-folded into wt/b, so only the
    # bias add and the leaky-relu select remain on the VPU (all in f32).
    y = jnp.dot(w_ref[...].astype(jnp.bfloat16), wt_ref[...],
                preferred_element_type=jnp.float32)             # (B, Cc*RR) f32
    y = y + b_ref[...]
    y = jnp.where(y >= 0.0, y, LRELU_SLOPE * y)                  # gain already folded
    var = y.reshape(b, cc, rr)

    # Assemble the full (B, 24, 256) slab in registers and store once: the minor dims
    # (24, 256) are (8,128)-tile aligned, so every vst is an unmasked full-tile store.
    out_ref[...] = jnp.concatenate([const_b, motion, var], axis=1)


# ---------------------------------------------------------------------------
# Wrapper: TemporalInput.forward
# ---------------------------------------------------------------------------
def temporal_input_forward(params, t, motion_w, w=None):
    """Pallas-backed TemporalInput.forward.  `t` is unused (as in the torch code)."""
    del t
    B, cm = motion_w.shape
    res = RESOLUTION
    rr = res * res

    const = params["const"].reshape(-1, rr)        # (Cc, RR) — metadata-only reshape
    cc = const.shape[0]
    mw3 = motion_w.reshape(B, cm, 1)               # metadata-only reshape; no astype copy

    if params.get("fc_wt") is None:
        # has_const=True, has_variable_input=False (default constructor)
        c_total = cc + cm
        out_flat = pl.pallas_call(
            _const_motion_kernel,
            grid=(1,),
            in_specs=[
                pl.BlockSpec((cc, rr), lambda i: (0, 0)),
                pl.BlockSpec((B, cm, 1), lambda i: (0, 0, 0)),
            ],
            out_specs=pl.BlockSpec((B, c_total, rr), lambda i: (0, 0, 0)),
            out_shape=jax.ShapeDtypeStruct((B, c_total, rr), jnp.float32),
            compiler_params=_CPARAMS,
        )(const, mw3)
    else:
        # has_const=True, has_variable_input=True, var_repeat=False
        wt = params["fc_wt"]                        # (Dw, Cc*RR) bf16, gains folded
        bias = params["fc_b"]                       # (1, Cc*RR)  f32, gain folded
        dw = wt.shape[0]
        c_total = cc + cm + cc
        out_flat = pl.pallas_call(
            _const_motion_fc_kernel,
            grid=(1,),
            in_specs=[
                pl.BlockSpec((cc, rr), lambda i: (0, 0)),
                pl.BlockSpec((B, cm, 1), lambda i: (0, 0, 0)),
                pl.BlockSpec((B, dw), lambda i: (0, 0)),
                pl.BlockSpec((dw, cc * rr), lambda i: (0, 0)),
                pl.BlockSpec((1, cc * rr), lambda i: (0, 0)),
            ],
            out_specs=pl.BlockSpec((B, c_total, rr), lambda i: (0, 0, 0)),
            out_shape=jax.ShapeDtypeStruct((B, c_total, rr), jnp.float32),
            compiler_params=_CPARAMS,
        )(const, mw3, w, wt, bias)

    # free (contiguous) reshape back to the NCHW view the torch module returns
    return out_flat.reshape(B, c_total, res, res)


# ---------------------------------------------------------------------------
# Parameter init (matches the torch module's parameterization)
# ---------------------------------------------------------------------------
def init_params(key, *, has_variable_input=True):
    k_const, k_w, k_b = jax.random.split(key, 3)
    params = {
        "const": jax.random.normal(
            k_const, (1, CHANNEL_DIM, RESOLUTION, RESOLUTION), jnp.float32),
        "fc_weight": None, "fc_bias": None,   # raw torch-style parameters (reference)
        "fc_wt": None, "fc_b": None,          # kernel-side: transposed, gains folded
    }
    if has_variable_input:
        # var_repeat=False: fc maps w_dim -> channel_dim * resolution**2.
        fc_out = CHANNEL_DIM * RESOLUTION * RESOLUTION
        weight = jax.random.normal(k_w, (fc_out, W_DIM), jnp.float32)   # torch: randn(out, in)
        bias = 0.1 * jax.random.normal(k_b, (fc_out,), jnp.float32)     # torch default 0; nonzero to exercise the add
        params["fc_weight"] = weight
        params["fc_bias"] = bias
        weight_gain = 1.0 / math.sqrt(W_DIM)                            # eqLR gain (lr_mult = 1)
        # Fold eqLR gain + post-lrelu gain sqrt(2) into the kernel-side weight/bias
        # (g * lrelu(x) == lrelu(g * x) for g > 0).  bf16 weights: the MXU's default
        # f32 precision already rounds operands to bf16, so this only halves the DMA.
        params["fc_wt"] = (weight.T * (weight_gain * LRELU_GAIN)).astype(jnp.bfloat16)  # (Dw, fc_out)
        params["fc_b"] = (bias * LRELU_GAIN).reshape(1, fc_out)                         # f32
    # TODO(synk): var_repeat=True branch (fc -> (B, C), spatially repeated) and the
    # has_const=False branch of the torch module are not implemented.
    return params


# ---------------------------------------------------------------------------
# Pure-JAX reference (mirrors the torch forward with the RAW parameterization,
# so it also validates the gain folding done at init)
# ---------------------------------------------------------------------------
def reference_forward(params, t, motion_w, w=None):
    del t
    B = motion_w.shape[0]
    res = RESOLUTION
    const_rep = jnp.broadcast_to(params["const"],
                                 (B,) + params["const"].shape[1:])
    mw_rep = jnp.broadcast_to(motion_w[:, :, None, None],
                              (B, motion_w.shape[1], res, res))
    out = jnp.concatenate([const_rep, mw_rep], axis=1)
    if params.get("fc_weight") is not None:
        weight_gain = 1.0 / math.sqrt(W_DIM)
        y = w @ (params["fc_weight"].T * weight_gain) + params["fc_bias"]
        y = jnp.where(y >= 0.0, y, LRELU_SLOPE * y) * LRELU_GAIN
        out = jnp.concatenate([out, y.reshape(B, -1, res, res)], axis=1)
    return out


# ---------------------------------------------------------------------------
if __name__ == "__main__":
    root = jax.random.PRNGKey(0)
    k_par, k_mw, k_w, k_t = jax.random.split(root, 4)

    t = jax.random.randint(k_t, (BATCH,), 0, 64).astype(jnp.float32)  # unused by forward
    motion_w = jax.random.normal(k_mw, (BATCH, MOTION_W_DIM), jnp.float32)
    w = jax.random.normal(k_w, (BATCH, W_DIM), jnp.float32)

    fwd = jax.jit(temporal_input_forward)

    # Config 1: has_const=True, has_variable_input=True (var_repeat=False)
    params = init_params(k_par, has_variable_input=True)
    out = fwd(params, t, motion_w, w)
    jax.block_until_ready(out)
    assert out.shape == (BATCH, CHANNEL_DIM + MOTION_W_DIM + CHANNEL_DIM,
                         RESOLUTION, RESOLUTION)
    assert bool(jnp.all(jnp.isfinite(out)))
    ref = reference_forward(params, t, motion_w, w)
    # 2e-2 tolerance: FC uses bf16 MXU inputs with f32 accumulation (same rounding the
    # default-precision f32 matmul already applies on TPU).
    np.testing.assert_allclose(np.asarray(out), np.asarray(ref), atol=2e-2, rtol=2e-2)

    # Config 2: default constructor (has_const=True, has_variable_input=False)
    params2 = init_params(k_par, has_variable_input=False)
    out2 = fwd(params2, t, motion_w)
    jax.block_until_ready(out2)
    assert out2.shape == (BATCH, CHANNEL_DIM + MOTION_W_DIM, RESOLUTION, RESOLUTION)
    ref2 = reference_forward(params2, t, motion_w)
    np.testing.assert_allclose(np.asarray(out2), np.asarray(ref2), atol=1e-6, rtol=1e-6)

    print("KERNEL_OK")
</pallas_src>

<mosaic_0001>
module attributes {stable_mosaic.version = 11 : i64} {
  func.func @_const_motion_fc_kernel(%arg0: i32, %arg1: memref<4x256xf32, #tpu.memory_space<vmem>>, %arg2: memref<2x16x1xf32, #tpu.memory_space<vmem>>, %arg3: memref<2x32xf32, #tpu.memory_space<vmem>>, %arg4: memref<32x1024xbf16, #tpu.memory_space<vmem>>, %arg5: memref<1x1024xf32, #tpu.memory_space<vmem>>, %arg6: memref<2x24x256xf32, #tpu.memory_space<vmem>>) attributes {dimension_semantics = [#tpu.dimension_semantics<arbitrary>], iteration_bounds = array<i64: 1>, scalar_prefetch = 0 : i64, scratch_operands = 0 : i64, tpu.core_type = #tpu.core_type<tc>, window_params = [{pipeline_mode = #tpu.pipeline_mode<synchronous>, transform_indices = @transform_0, window_bounds = array<i64: 4, 256>}, {pipeline_mode = #tpu.pipeline_mode<synchronous>, transform_indices = @transform_1, window_bounds = array<i64: 2, 16, 1>}, {pipeline_mode = #tpu.pipeline_mode<synchronous>, transform_indices = @transform_2, window_bounds = array<i64: 2, 32>}, {pipeline_mode = #tpu.pipeline_mode<synchronous>, transform_indices = @transform_3, window_bounds = array<i64: 32, 1024>}, {pipeline_mode = #tpu.pipeline_mode<synchronous>, transform_indices = @transform_4, window_bounds = array<i64: 1, 1024>}, {pipeline_mode = #tpu.pipeline_mode<synchronous>, transform_indices = @transform_5, window_bounds = array<i64: 2, 24, 256>}]} {
    %c0 = arith.constant 0 : index
    %c0_0 = arith.constant 0 : index
    %0 = vector.load %arg1[%c0, %c0_0] : memref<4x256xf32, #tpu.memory_space<vmem>>, vector<4x256xf32>
    %1 = vector.shape_cast %0 : vector<4x256xf32> to vector<1x4x256xf32>
    %2 = vector.shape_cast %1 : vector<1x4x256xf32> to vector<1x4x256xf32>
    %3 = vector.broadcast %2 : vector<1x4x256xf32> to vector<2x4x256xf32>
    %c0_1 = arith.constant 0 : index
    %c0_2 = arith.constant 0 : index
    %c0_3 = arith.constant 0 : index
    %4 = vector.load %arg2[%c0_1, %c0_2, %c0_3] : memref<2x16x1xf32, #tpu.memory_space<vmem>>, vector<2x16x1xf32>
    %5 = vector.shape_cast %4 : vector<2x16x1xf32> to vector<2x16x1xf32>
    %6 = vector.broadcast %5 : vector<2x16x1xf32> to vector<2x16x256xf32>
    %c0_4 = arith.constant 0 : index
    %c0_5 = arith.constant 0 : index
    %7 = vector.load %arg3[%c0_4, %c0_5] : memref<2x32xf32, #tpu.memory_space<vmem>>, vector<2x32xf32>
    %8 = arith.truncf %7 : vector<2x32xf32> to vector<2x32xbf16>
    %c0_6 = arith.constant 0 : index
    %c0_7 = arith.constant 0 : index
    %9 = vector.load %arg4[%c0_6, %c0_7] : memref<32x1024xbf16, #tpu.memory_space<vmem>>, vector<32x1024xbf16>
    %cst = arith.constant dense<0.000000e+00> : vector<2x1024xf32>
    %10 = tpu.matmul %8, %9, %cst {dimension_numbers = #tpu.dot_dimension_numbers<[1], [0], [0], [1], [0, 0, 1, 1], [], []>} : vector<2x32xbf16>, vector<32x1024xbf16>, vector<2x1024xf32> -> vector<2x1024xf32>
    %c0_8 = arith.constant 0 : index
    %c0_9 = arith.constant 0 : index
    %11 = vector.load %arg5[%c0_8, %c0_9] : memref<1x1024xf32, #tpu.memory_space<vmem>>, vector<1x1024xf32>
    %12 = vector.broadcast %11 : vector<1x1024xf32> to vector<2x1024xf32>
    %13 = arith.addf %10, %12 : vector<2x1024xf32>
    %cst_10 = arith.constant 0.000000e+00 : f32
    %14 = vector.broadcast %cst_10 : f32 to vector<2x1024xf32>
    %15 = arith.cmpf oge, %13, %14 : vector<2x1024xf32>
    %cst_11 = arith.constant 2.000000e-01 : f32
    %16 = vector.broadcast %cst_11 : f32 to vector<2x1024xf32>
    %17 = arith.mulf %16, %13 : vector<2x1024xf32>
    %18 = arith.select %15, %13, %17 : vector<2x1024xi1>, vector<2x1024xf32>
    %19 = vector.shape_cast %18 : vector<2x1024xf32> to vector<2x4x256xf32>
    %20 = tpu.concatenate %3, %6, %19 in 1 : vector<2x4x256xf32>, vector<2x16x256xf32>, vector<2x4x256xf32> -> vector<2x24x256xf32>
    %c0_12 = arith.constant 0 : index
    %c0_13 = arith.constant 0 : index
    %c0_14 = arith.constant 0 : index
    %21 = vector.load %arg6[%c0_12, %c0_13, %c0_14] : memref<2x24x256xf32, #tpu.memory_space<vmem>>, vector<2x24x256xf32>
    tpu.vector_store %arg6[%c0_12, %c0_13, %c0_14], %20 {strides = array<i32>} : memref<2x24x256xf32, #tpu.memory_space<vmem>>, vector<2x24x256xf32>,
    return
  }
  func.func @transform_0(%arg0: i32) -> (i32, i32) {
    %c0_i32 = arith.constant 0 : i32
    %c0_i32_0 = arith.constant 0 : i32
    %c0_i32_1 = arith.constant 0 : i32
    return %c0_i32, %c0_i32_0 : i32, i32
  }
  func.func @transform_1(%arg0: i32) -> (i32, i32, i32) {
    %c0_i32 = arith.constant 0 : i32
    %c0_i32_0 = arith.constant 0 : i32
    %c0_i32_1 = arith.constant 0 : i32
    %c0_i32_2 = arith.constant 0 : i32
    return %c0_i32, %c0_i32_0, %c0_i32_1 : i32, i32, i32
  }
  func.func @transform_2(%arg0: i32) -> (i32, i32) {
    %c0_i32 = arith.constant 0 : i32
    %c0_i32_0 = arith.constant 0 : i32
    %c0_i32_1 = arith.constant 0 : i32
    return %c0_i32, %c0_i32_0 : i32, i32
  }
  func.func @transform_3(%arg0: i32) -> (i32, i32) {
    %c0_i32 = arith.constant 0 : i32
    %c0_i32_0 = arith.constant 0 : i32
    %c0_i32_1 = arith.constant 0 : i32
    return %c0_i32, %c0_i32_0 : i32, i32
  }
  func.func @transform_4(%arg0: i32) -> (i32, i32) {
    %c0_i32 = arith.constant 0 : i32
    %c0_i32_0 = arith.constant 0 : i32
    %c0_i32_1 = arith.constant 0 : i32
    return %c0_i32, %c0_i32_0 : i32, i32
  }
  func.func @transform_5(%arg0: i32) -> (i32, i32, i32) {
    %c0_i32 = arith.constant 0 : i32
    %c0_i32_0 = arith.constant 0 : i32
    %c0_i32_1 = arith.constant 0 : i32
    %c0_i32_2 = arith.constant 0 : i32
    return %c0_i32, %c0_i32_0, %c0_i32_1 : i32, i32, i32
  }
}

</mosaic_0001>

<llo_original>
// kernel: temporal_input_forward.1
$region0: #{temporal_input_forward.1}
  #allocation0 [shape = 'u32[]', space=smem, size = 0x4, offset = 0x4, fixed_abs, tag = 'smem constant byte address 0x4 - core index']
  #allocation1 [shape = 'u32[144,128]{1,0:T(1,128)}', space=vmem, size = 0x12000, scoped, tag = 'internal scratch']
  %s0 = inlined_call_operand.vmem [shape: f32[4,256], index: 0, kind: input, shape index: {}]
  %s1 = inlined_call_operand.vmem [shape: f32[2,16,1], index: 1, kind: input, shape index: {}]
  %s2 = inlined_call_operand.vmem [shape: f32[2,32], index: 2, kind: input, shape index: {}]
  %s3 = inlined_call_operand.hbm [shape: bf16[32,1024], index: 3, kind: input, shape index: {}]
  %s4 = inlined_call_operand.vmem [shape: f32[1,1024], index: 4, kind: input, shape index: {}]
  %s5 = inlined_call_operand.vmem [shape: f32[2,24,256], index: 5, kind: output, shape index: {}]
  %s6 = sld [smem:[#allocation0]]
  $region34: #{temporal_input_forward.1} parent=0
    _
  %s8 = ssub.s32 1, %s6
  %s9 = scalar_select 0, %s8, %s6
  $region1: #{temporal_input_forward.1} parent=0
    #allocation2 [shape = 'u8[65536]{0}', space=vmem, size = 0x10000, scoped, tag = 'input window, operand 3, single buffered']
    #allocation3 [shape = 's32[1]{0}', space=sflag, size = 0x4, scoped, tag = 'scoped memory for temporal_input_forward.1']
    %10 = vsyncpa [#allocation3], 0
    // Predicated region
    $region2: #{temporal_input_forward.1} parent=1 // pred_check
      _
    $region3: #{temporal_input_forward.1} parent=1 // pred_check_branch
      %12 = sbr.rel (0) target = $region5
    $region4: #{temporal_input_forward.1} parent=1 // pred_region
      _
    $region5: #{temporal_input_forward.1} parent=1 // pred_fallthru
      _
    // Predicated region
    $region6: #{temporal_input_forward.1} parent=1 // pred_check
      _
    $region7: #{temporal_input_forward.1} parent=1 // pred_check_branch
      %14 = sbr.rel (0) target = $region9
    $region8: #{temporal_input_forward.1} parent=1 // pred_region
      _
    $region9: #{temporal_input_forward.1} parent=1 // pred_fallthru
      _
    // Predicated region
    $region10: #{temporal_input_forward.1} parent=1 // pred_check
      _
    $region11: #{temporal_input_forward.1} parent=1 // pred_check_branch
      %16 = sbr.rel (0) target = $region13
    $region12: #{temporal_input_forward.1} parent=1 // pred_region
      _
    $region13: #{temporal_input_forward.1} parent=1 // pred_fallthru
      _
    // Predicated region
    $region14: #{temporal_input_forward.1} parent=1 // pred_check
      _
    $region15: #{temporal_input_forward.1} parent=1 // pred_check_branch
      %18 = sbr.rel (0) target = $region17
    $region16: #{temporal_input_forward.1} parent=1 // pred_region
      %s20 = ssub.s32 2048, 2048
      %21 = vsyncadd [#allocation3], %s20
      %s22 = sshll.u32 [#allocation2], 4
      %s23 = int_to_ptr.vmem [resolvable:$true] %s22
      %28 = dma.hbm_to_vmem [thread:$0]  %s3, 2048, %s23, [#allocation3], 512, 512, 32
    $region17: #{temporal_input_forward.1} parent=1 // pred_fallthru
      _
    // Predicated region
    $region18: #{temporal_input_forward.1} parent=1 // pred_check
      _
    $region19: #{temporal_input_forward.1} parent=1 // pred_check_branch
      %30 = sbr.rel (0) target = $region21
    $region20: #{temporal_input_forward.1} parent=1 // pred_region
      _
    $region21: #{temporal_input_forward.1} parent=1 // pred_fallthru
      _
    // Predicated region
    $region22: #{temporal_input_forward.1} parent=1 // pred_check
      _
    $region23: #{temporal_input_forward.1} parent=1 // pred_check_branch
      %32 = sbr.rel (0) target = $region25
    $region24: #{temporal_input_forward.1} parent=1 // pred_region
      %33 = dma.done [#allocation3], 2048
    $region25: #{temporal_input_forward.1} parent=1 // pred_fallthru
      _
    %v35 = vld [vmem:[%s0] sm:$0xff]
    %v36 = vld [vmem:[%s1] sm:$0xff]
    %v37 = vld [vmem:[%s1 + $0x8] sm:$0xff]
    %v38 = vld [vmem:[%s1 + $0x10] sm:$0xff]
    %v39 = vld [vmem:[%s1 + $0x18] sm:$0xff]
    %41 = vset.pattern.permute.xlu0 0
    %42 = vperm.xlu0 %41, %v36
    %v43 = vpop.permute.xlu0 %42
    %45 = vset.pattern.permute.xlu0 0
    %46 = vperm.xlu0 %45, %v37
    %v47 = vpop.permute.xlu0 %46
    %49 = vset.pattern.permute.xlu0 0
    %50 = vperm.xlu0 %49, %v38
    %v51 = vpop.permute.xlu0 %50
    %53 = vset.pattern.permute.xlu0 0
    %54 = vperm.xlu0 %53, %v39
    %v55 = vpop.permute.xlu0 %54
    %v56 = vld [vmem:[%s2] sm:$0x3]
    %v57 = vpack.c.bf16 %v56, %v56
    %v58 = vld [vmem:[#allocation2] sm:$0xff]
    %v59 = vld [vmem:[#allocation2 + $0x8] sm:$0xff]
    %v60 = vld [vmem:[#allocation2 + $0x10] sm:$0xff]
    %v61 = vld [vmem:[#allocation2 + $0x18] sm:$0xff]
    %v62 = vld [vmem:[#allocation2 + $0x20] sm:$0xff]
    %v63 = vld [vmem:[#allocation2 + $0x28] sm:$0xff]
    %v64 = vld [vmem:[#allocation2 + $0x30] sm:$0xff]
    %v65 = vld [vmem:[#allocation2 + $0x38] sm:$0xff]
    %v66 = vld [vmem:[#allocation2 + $0x40] sm:$0xff]
    %v67 = vld [vmem:[#allocation2 + $0x48] sm:$0xff]
    %v68 = vld [vmem:[#allocation2 + $0x50] sm:$0xff]
    %v69 = vld [vmem:[#allocation2 + $0x58] sm:$0xff]
    %v70 = vld [vmem:[#allocation2 + $0x60] sm:$0xff]
    %v71 = vld [vmem:[#allocation2 + $0x68] sm:$0xff]
    %v72 = vld [vmem:[#allocation2 + $0x70] sm:$0xff]
    %v73 = vld [vmem:[#allocation2 + $0x78] sm:$0xff]
    %v74 = vld [vmem:[%s4] sm:$0xff]
    %v76 = vlaneseq
    %v77 = vshrl.u32 %v76, 7
    %v78 = vsub.s32 0, %v77
    %v79 = vrot.slane %v74, %v78
    %v80 = vlaneseq
    %v81 = vshrl.u32 %v80, 7
    %v82 = vsub.s32 1, %v81
    %v83 = vrot.slane %v74, %v82
    %v84 = vlaneseq
    %v85 = vshrl.u32 %v84, 7
    %v86 = vsub.s32 2, %v85
    %v87 = vrot.slane %v74, %v86
    %v88 = vlaneseq
    %v89 = vshrl.u32 %v88, 7
    %v90 = vsub.s32 3, %v89
    %v91 = vrot.slane %v74, %v90
    %v92 = vlaneseq
    %v93 = vshrl.u32 %v92, 7
    %v94 = vsub.s32 4, %v93
    %v95 = vrot.slane %v74, %v94
    %v96 = vlaneseq
    %v97 = vshrl.u32 %v96, 7
    %v98 = vsub.s32 5, %v97
    %v99 = vrot.slane %v74, %v98
    %v100 = vlaneseq
    %v101 = vshrl.u32 %v100, 7
    %v102 = vsub.s32 6, %v101
    %v103 = vrot.slane %v74, %v102
    %v104 = vlaneseq
    %v105 = vshrl.u32 %v104, 7
    %v106 = vsub.s32 7, %v105
    %v107 = vrot.slane %v74, %v106
    %v132 = vunpack.c.l.b16 %v58
    %v133 = vunpack.c.h.b16 %v58
    %v134 = vunpack.c.l.b16 %v59
    %v135 = vunpack.c.h.b16 %v59
    %v136 = vunpack.c.l.b16 %v60
    %v137 = vunpack.c.h.b16 %v60
    %v138 = vunpack.c.l.b16 %v61
    %v139 = vunpack.c.h.b16 %v61
    %v140 = vunpack.c.l.b16 %v62
    %v141 = vunpack.c.h.b16 %v62
    %v142 = vunpack.c.l.b16 %v63
    %v143 = vunpack.c.h.b16 %v63
    %v144 = vunpack.c.l.b16 %v64
    %v145 = vunpack.c.h.b16 %v64
    %v146 = vunpack.c.l.b16 %v65
    %v147 = vunpack.c.h.b16 %v65
    %v148 = vunpack.c.l.b16 %v66
    %v149 = vunpack.c.h.b16 %v66
    %v150 = vunpack.c.l.b16 %v67
    %v151 = vunpack.c.h.b16 %v67
    %v152 = vunpack.c.l.b16 %v68
    %v153 = vunpack.c.h.b16 %v68
    %v154 = vunpack.c.l.b16 %v69
    %v155 = vunpack.c.h.b16 %v69
    %v156 = vunpack.c.l.b16 %v70
    %v157 = vunpack.c.h.b16 %v70
    %v158 = vunpack.c.l.b16 %v71
    %v159 = vunpack.c.h.b16 %v71
    %v160 = vunpack.c.l.b16 %v72
    %v161 = vunpack.c.h.b16 %v72
    %v162 = vunpack.c.l.b16 %v73
    %v163 = vunpack.c.h.b16 %v73
    %v164 = vpack.c.b16 %v140, %v132
    %v165 = vpack.c.b16 %v141, %v133
    %v166 = vpack.c.b16 %v142, %v134
    %v167 = vpack.c.b16 %v143, %v135
    %v168 = vpack.c.b16 %v144, %v136
    %v169 = vpack.c.b16 %v145, %v137
    %v170 = vpack.c.b16 %v146, %v138
    %v171 = vpack.c.b16 %v147, %v139
    %v172 = vpack.c.b16 %v156, %v148
    %v173 = vpack.c.b16 %v157, %v149
    %v174 = vpack.c.b16 %v158, %v150
    %v175 = vpack.c.b16 %v159, %v151
    %v176 = vpack.c.b16 %v160, %v152
    %v177 = vpack.c.b16 %v161, %v153
    %v178 = vpack.c.b16 %v162, %v154
    %v179 = vpack.c.b16 %v163, %v155
    %vm196 = vcmask 261120
    %v198 = vsel %vm196, %v57, 0
    %200 = vmatprep.subr.bf16.mxu0 %v165
    %201 = vmatpush1.bf16.msra.mxu0 %v164
    %202 = vmatprep.subr.bf16.mxu0 %v173
    %203 = vmatpush1.bf16.msra.mxu0 %v172
    %204 = vmatprep.subr.bf16.mxu0 0
    %205 = vmatpush1.bf16.msra.mxu0 0
    %206 = vmatprep.subr.bf16.mxu0 0
    %207 = vmatpush1.bf16.msra.mxu0 0
    %208 = vmatprep.subr.bf16.mxu0 0
    %209 = vmatpush1.bf16.msra.mxu0 0
    %210 = vmatprep.subr.bf16.mxu0 0
    %211 = vmatpush1.bf16.msra.mxu0 0
    %212 = vmatprep.subr.bf16.mxu0 0
    %213 = vmatpush1.bf16.msra.mxu0 0
    %214 = vmatprep.subr.bf16.mxu0 0
    %215 = vmatpush1.bf16.msra.mxu0 0
    %216 = vmatprep.subr.bf16.mxu0 0
    %217 = vmatpush1.bf16.msra.mxu0 0
    %218 = vmatprep.subr.bf16.mxu0 0
    %219 = vmatpush1.bf16.msra.mxu0 0
    %220 = vmatprep.subr.bf16.mxu0 0
    %221 = vmatpush1.bf16.msra.mxu0 0
    %222 = vmatprep.subr.bf16.mxu0 0
    %223 = vmatpush1.bf16.msra.mxu0 0
    %224 = vmatprep.subr.bf16.mxu0 0
    %225 = vmatpush1.bf16.msra.mxu0 0
    %226 = vmatprep.subr.bf16.mxu0 0
    %227 = vmatpush1.bf16.msra.mxu0 0
    %228 = vmatprep.subr.bf16.mxu0 0
    %229 = vmatpush1.bf16.msra.mxu0 0
    %230 = vmatprep.subr.bf16.mxu0 0
    %231 = vmatpush1.bf16.msra.mxu0 0
    %232 = vmatprep.mubr.bf16.mxu0 0
    %233 = vmatmul.mubr.bf16.gmra.mrb[0].mxu0 %v198
    %v234 = vpop.f32.mrb[0].mxu0
    %v235 = vadd.f32 %v79, %v234
    %v236 = vpop.f32.mrb[0].mxu0
    %v237 = vadd.f32 %v83, %v236
    %v238 = vpop.f32.mrb[0].mxu0
    %v239 = vpop.f32.mrb[0].mxu0
    %240 = vdwg.mxu0
    %241 = vmatprep.subr.bf16.mxu0 %v167
    %242 = vmatpush1.bf16.msra.mxu0 %v166
    %243 = vmatprep.subr.bf16.mxu0 %v175
    %244 = vmatpush1.bf16.msra.mxu0 %v174
    %245 = vmatprep.subr.bf16.mxu0 0
    %246 = vmatpush1.bf16.msra.mxu0 0
    %247 = vmatprep.subr.bf16.mxu0 0
    %248 = vmatpush1.bf16.msra.mxu0 0
    %249 = vmatprep.subr.bf16.mxu0 0
    %250 = vmatpush1.bf16.msra.mxu0 0
    %251 = vmatprep.subr.bf16.mxu0 0
    %252 = vmatpush1.bf16.msra.mxu0 0
    %253 = vmatprep.subr.bf16.mxu0 0
    %254 = vmatpush1.bf16.msra.mxu0 0
    %255 = vmatprep.subr.bf16.mxu0 0
    %256 = vmatpush1.bf16.msra.mxu0 0
    %257 = vmatprep.subr.bf16.mxu0 0
    %258 = vmatpush1.bf16.msra.mxu0 0
    %259 = vmatprep.subr.bf16.mxu0 0
    %260 = vmatpush1.bf16.msra.mxu0 0
    %261 = vmatprep.subr.bf16.mxu0 0
    %262 = vmatpush1.bf16.msra.mxu0 0
    %263 = vmatprep.subr.bf16.mxu0 0
    %264 = vmatpush1.bf16.msra.mxu0 0
    %265 = vmatprep.subr.bf16.mxu0 0
    %266 = vmatpush1.bf16.msra.mxu0 0
    %267 = vmatprep.subr.bf16.mxu0 0
    %268 = vmatpush1.bf16.msra.mxu0 0
    %269 = vmatprep.subr.bf16.mxu0 0
    %270 = vmatpush1.bf16.msra.mxu0 0
    %271 = vmatprep.subr.bf16.mxu0 0
    %272 = vmatpush1.bf16.msra.mxu0 0
    %273 = vmatprep.mubr.bf16.mxu0 0
    %274 = vmatmul.mubr.bf16.gmra.mrb[0].mxu0 %v198
    %v275 = vpop.f32.mrb[0].mxu0
    %v276 = vadd.f32 %v87, %v275
    %v277 = vpop.f32.mrb[0].mxu0
    %v278 = vadd.f32 %v91, %v277
    %v279 = vpop.f32.mrb[0].mxu0
    %v280 = vpop.f32.mrb[0].mxu0
    %281 = vdwg.mxu0
    %282 = vmatprep.subr.bf16.mxu0 %v169
    %283 = vmatpush1.bf16.msra.mxu0 %v168
    %284 = vmatprep.subr.bf16.mxu0 %v177
    %285 = vmatpush1.bf16.msra.mxu0 %v176
    %286 = vmatprep.subr.bf16.mxu0 0
    %287 = vmatpush1.bf16.msra.mxu0 0
    %288 = vmatprep.subr.bf16.mxu0 0
    %289 = vmatpush1.bf16.msra.mxu0 0
    %290 = vmatprep.subr.bf16.mxu0 0
    %291 = vmatpush1.bf16.msra.mxu0 0
    %292 = vmatprep.subr.bf16.mxu0 0
    %293 = vmatpush1.bf16.msra.mxu0 0
    %294 = vmatprep.subr.bf16.mxu0 0
    %295 = vmatpush1.bf16.msra.mxu0 0
    %296 = vmatprep.subr.bf16.mxu0 0
    %297 = vmatpush1.bf16.msra.mxu0 0
    %298 = vmatprep.subr.bf16.mxu0 0
    %299 = vmatpush1.bf16.msra.mxu0 0
    %300 = vmatprep.subr.bf16.mxu0 0
    %301 = vmatpush1.bf16.msra.mxu0 0
    %302 = vmatprep.subr.bf16.mxu0 0
    %303 = vmatpush1.bf16.msra.mxu0 0
    %304 = vmatprep.subr.bf16.mxu0 0
    %305 = vmatpush1.bf16.msra.mxu0 0
    %306 = vmatprep.subr.bf16.mxu0 0
    %307 = vmatpush1.bf16.msra.mxu0 0
    %308 = vmatprep.subr.bf16.mxu0 0
    %309 = vmatpush1.bf16.msra.mxu0 0
    %310 = vmatprep.subr.bf16.mxu0 0
    %311 = vmatpush1.bf16.msra.mxu0 0
    %312 = vmatprep.subr.bf16.mxu0 0
    %313 = vmatpush1.bf16.msra.mxu0 0
    %314 = vmatprep.mubr.bf16.mxu0 0
    %315 = vmatmul.mubr.bf16.gmra.mrb[0].mxu0 %v198
    %v316 = vpop.f32.mrb[0].mxu0
    %v317 = vadd.f32 %v95, %v316
    %v318 = vpop.f32.mrb[0].mxu0
    %v319 = vadd.f32 %v99, %v318
    %v320 = vpop.f32.mrb[0].mxu0
    %v321 = vpop.f32.mrb[0].mxu0
    %322 = vdwg.mxu0
    %323 = vmatprep.subr.bf16.mxu0 %v171
    %324 = vmatpush1.bf16.msra.mxu0 %v170
    %325 = vmatprep.subr.bf16.mxu0 %v179
    %326 = vmatpush1.bf16.msra.mxu0 %v178
    %327 = vmatprep.subr.bf16.mxu0 0
    %328 = vmatpush1.bf16.msra.mxu0 0
    %329 = vmatprep.subr.bf16.mxu0 0
    %330 = vmatpush1.bf16.msra.mxu0 0
    %331 = vmatprep.subr.bf16.mxu0 0
    %332 = vmatpush1.bf16.msra.mxu0 0
    %333 = vmatprep.subr.bf16.mxu0 0
    %334 = vmatpush1.bf16.msra.mxu0 0
    %335 = vmatprep.subr.bf16.mxu0 0
    %336 = vmatpush1.bf16.msra.mxu0 0
    %337 = vmatprep.subr.bf16.mxu0 0
    %338 = vmatpush1.bf16.msra.mxu0 0
    %339 = vmatprep.subr.bf16.mxu0 0
    %340 = vmatpush1.bf16.msra.mxu0 0
    %341 = vmatprep.subr.bf16.mxu0 0
    %342 = vmatpush1.bf16.msra.mxu0 0
    %343 = vmatprep.subr.bf16.mxu0 0
    %344 = vmatpush1.bf16.msra.mxu0 0
    %345 = vmatprep.subr.bf16.mxu0 0
    %346 = vmatpush1.bf16.msra.mxu0 0
    %347 = vmatprep.subr.bf16.mxu0 0
    %348 = vmatpush1.bf16.msra.mxu0 0
    %349 = vmatprep.subr.bf16.mxu0 0
    %350 = vmatpush1.bf16.msra.mxu0 0
    %351 = vmatprep.subr.bf16.mxu0 0
    %352 = vmatpush1.bf16.msra.mxu0 0
    %353 = vmatprep.subr.bf16.mxu0 0
    %354 = vmatpush1.bf16.msra.mxu0 0
    %355 = vmatprep.mubr.bf16.mxu0 0
    %356 = vmatmul.mubr.bf16.gmra.mrb[0].mxu0 %v198
    %v357 = vpop.f32.mrb[0].mxu0
    %v358 = vadd.f32 %v103, %v357
    %v359 = vpop.f32.mrb[0].mxu0
    %v360 = vadd.f32 %v107, %v359
    %v361 = vpop.f32.mrb[0].mxu0
    %v362 = vpop.f32.mrb[0].mxu0
    %363 = vdwg.mxu0
    %vm364 = vcmp.ge.f32.partialorder %v235, 0.0
    %vm365 = vcmp.ge.f32.partialorder %v237, 0.0
    %vm366 = vcmp.ge.f32.partialorder %v276, 0.0
    %vm367 = vcmp.ge.f32.partialorder %v278, 0.0
    %vm368 = vcmp.ge.f32.partialorder %v317, 0.0
    %vm369 = vcmp.ge.f32.partialorder %v319, 0.0
    %vm370 = vcmp.ge.f32.partialorder %v358, 0.0
    %vm371 = vcmp.ge.f32.partialorder %v360, 0.0
    %v372 = vmul.f32 %v235, 0.2
    %v373 = vmul.f32 %v237, 0.2
    %v374 = vmul.f32 %v276, 0.2
    %v375 = vmul.f32 %v278, 0.2
    %v376 = vmul.f32 %v317, 0.2
    %v377 = vmul.f32 %v319, 0.2
    %v378 = vmul.f32 %v358, 0.2
    %v379 = vmul.f32 %v360, 0.2
    %v380 = vsel %vm364, %v235, %v372
    %v381 = vsel %vm365, %v237, %v373
    %v382 = vsel %vm366, %v276, %v374
    %v383 = vsel %vm367, %v278, %v375
    %v384 = vsel %vm368, %v317, %v376
    %v385 = vsel %vm369, %v319, %v377
    %v386 = vsel %vm370, %v358, %v378
    %v387 = vsel %vm371, %v360, %v379
    %v388 = vcombine.low %v380, %v384
    %v390 = vunpack.c.l.s4 1983009808
    %v391 = vunpack.c.0.s8 %v390
    %v392 = vlaneseq
    %v393 = vshrl.u32 %v392, 7
    %v394 = vsub.s32 %v391, %v393
    %v395 = vrot.slane %v388, %v394
    %v396 = vcombine.low %v382, %v386
    %v398 = vunpack.c.l.s4 1983009808
    %v399 = vunpack.c.0.s8 %v398
    %v400 = vlaneseq
    %v401 = vshrl.u32 %v400, 7
    %v402 = vsub.s32 %v399, %v401
    %v403 = vrot.slane %v396, %v402
    %v404 = vcombine.low %v395, %v403
    %v406 = vunpack.c.l.s4 1934713408
    %v407 = vunpack.c.0.s8 %v406
    %v408 = vlaneseq
    %v409 = vshrl.u32 %v408, 7
    %v410 = vsub.s32 %v407, %v409
    %v411 = vrot.slane %v404, %v410
    %v412 = vcombine.high %v411, 0.0
    %v413 = vcombine.low %v381, %v385
    %v415 = vunpack.c.l.s4 1983009808
    %v416 = vunpack.c.0.s8 %v415
    %v417 = vlaneseq
    %v418 = vshrl.u32 %v417, 7
    %v419 = vsub.s32 %v416, %v418
    %v420 = vrot.slane %v413, %v419
    %v421 = vcombine.low %v383, %v387
    %v423 = vunpack.c.l.s4 1983009808
    %v424 = vunpack.c.0.s8 %v423
    %v425 = vlaneseq
    %v426 = vshrl.u32 %v425, 7
    %v427 = vsub.s32 %v424, %v426
    %v428 = vrot.slane %v421, %v427
    %v429 = vcombine.low %v420, %v428
    %v431 = vunpack.c.l.s4 1934713408
    %v432 = vunpack.c.0.s8 %v431
    %v433 = vlaneseq
    %v434 = vshrl.u32 %v433, 7
    %v435 = vsub.s32 %v432, %v434
    %v436 = vrot.slane %v429, %v435
    %v437 = vcombine.high %v436, 0.0
    %v439 = vcombine.high %v35, %v35
    %vm441 = vcmask 1043456
    %v442 = vrot.slane %v43, 4
    %v443 = vrot.slane %v47, 4
    %v444 = vsel %vm441, %v442, %v443
    %v445 = vrot.slane %v51, 4
    %v446 = vrot.slane %v55, 4
    %v447 = vsel %vm441, %v445, %v446
    %v458 = vrot.slane %v411, 4
    %v459 = vrot.slane %v436, 4
    %v460 = vrot.slane %v412, 4
    %v461 = vrot.slane %v437, 4
    %v466 = vsel %vm441, %v35, %v442
    %v467 = vsel %vm441, %v439, %v442
    %v468 = vsel %vm441, %v35, %v445
    %v469 = vsel %vm441, %v439, %v445
    %v470 = vsel %vm441, %v443, %v458
    %v471 = vsel %vm441, %v443, %v459
    %v472 = vsel %vm441, %v446, %v460
    %v473 = vsel %vm441, %v446, %v461
    %474 = vst [vmem:[%s5] sm:$0xff] %v466
    %475 = vst [vmem:[%s5 + $0x8] sm:$0xff] %v467
    %476 = vst [vmem:[%s5 + $0x10] sm:$0xff] %v444
    %477 = vst [vmem:[%s5 + $0x18] sm:$0xff] %v444
    %478 = vst [vmem:[%s5 + $0x20] sm:$0xff] %v470
    %479 = vst [vmem:[%s5 + $0x28] sm:$0xff] %v471
    %480 = vst [vmem:[%s5 + $0x30] sm:$0xff] %v468
    %481 = vst [vmem:[%s5 + $0x38] sm:$0xff] %v469
    %482 = vst [vmem:[%s5 + $0x40] sm:$0xff] %v447
    %483 = vst [vmem:[%s5 + $0x48] sm:$0xff] %v447
    %484 = vst [vmem:[%s5 + $0x50] sm:$0xff] %v472
    %485 = vst [vmem:[%s5 + $0x58] sm:$0xff] %v473
    // Predicated region
    $region26: #{temporal_input_forward.1} parent=1 // pred_check
      _
    $region27: #{temporal_input_forward.1} parent=1 // pred_check_branch
      %487 = sbr.rel (0) target = $region29
    $region28: #{temporal_input_forward.1} parent=1 // pred_region
      _
    $region29: #{temporal_input_forward.1} parent=1 // pred_fallthru
      _
    // Predicated region
    $region30: #{temporal_input_forward.1} parent=1 // pred_check
      _
    $region31: #{temporal_input_forward.1} parent=1 // pred_check_branch
      %489 = sbr.rel (0) target = $region33
    $region32: #{temporal_input_forward.1} parent=1 // pred_region
      _
    $region33: #{temporal_input_forward.1} parent=1 // pred_fallthru
      _
    %490 = vsyncpa [#allocation3], 1

</llo_original>
